<compile_context>
chip_gen: v5e
topology: v5e:2x2
jax: 0.10.0
libtpu: 0.0.40
codegen_flags: <defaults>
</compile_context>

<pallas_src>
import functools

import jax
import jax.numpy as jnp
from jax import lax
from jax.experimental import pallas as pl
from jax.experimental.pallas import tpu as pltpu

DENSE_FEAT = 1920                     # densenet201 feature width (classifier = Identity)
MOBILE_FEAT = 1280                    # mobilenet_v2 feature width (classifier = Identity)
F_TOTAL = DENSE_FEAT + MOBILE_FEAT    # 3200 (torch.cat((x1, x2), dim=1))
HIDDEN = 512
NUM_CLASSES = 6
CLS_PAD = 128                         # lane-dense padded class dim
C_IN = 3                              # RGB input
C_PAD = 8                             # real channels (3) + ones/bias channel (1) + zero pad -> 8
F_CHUNK = 128                         # feature-axis chunk (lane width)
N_CHUNKS = F_TOTAL // F_CHUNK         # 25
S_TILE_MAX = 256                      # spatial tile (sublane / reduction axis)


# ----------------------------- kernel ---------------------------------------

def rwcnet_kernel(x_ref, bw_ref, w1_ref, b1_ref, w2_ref, b2_ref,
                  out_ref, acc_ref, *, s_total, s_tile):
    """Fused backbone stand-in (1x1 conv + ReLU + global avg pool) + fc head + LogSoftmax."""
    s = pl.program_id(1)

    @pl.when(s == 0)
    def _init():
        acc_ref[...] = jnp.zeros_like(acc_ref)

    x_t = x_ref[0]                                    # (s_tile, C_PAD) bf16 — natural MXU lhs
    ones_row = jnp.ones((1, s_tile), jnp.bfloat16)    # pooling matvec lhs (K = s_tile)

    def fchunk(c, carry):
        # per-pixel channel contraction for one 128-wide feature chunk
        h = jnp.dot(x_t, bw_ref[c], preferred_element_type=jnp.float32)   # (s_tile, F_CHUNK) f32
        # ReLU (bias is folded into bw via the constant-1 input channel); cast feeds the MXU
        # pooling matvec.  (max kept in f32 so the same code path is fine on v5e, no bf16 VPU.)
        h = jnp.maximum(h, 0.0).astype(jnp.bfloat16)
        # spatial-sum via MXU ones-matvec instead of an XLU sublane reduce
        psum = jnp.dot(ones_row, h, preferred_element_type=jnp.float32)   # (1, F_CHUNK) f32
        acc_ref[c] += psum
        return carry

    lax.fori_loop(0, N_CHUNKS, fchunk, 0)

    @pl.when(s == pl.num_programs(1) - 1)
    def _head():
        inv_s = jnp.float32(1.0 / s_total)            # adaptive_avg_pool2d(1,1)

        # fc1 as a K-chunked matmul directly over the chunked accumulator (no reshape needed).
        def fc1_chunk(c, h1):
            feats_c = (acc_ref[c] * inv_s).astype(jnp.bfloat16)           # (1, F_CHUNK)
            return h1 + jnp.dot(feats_c, w1_ref[c], preferred_element_type=jnp.float32)

        h1 = lax.fori_loop(0, N_CHUNKS, fc1_chunk,
                           jnp.zeros((1, HIDDEN), jnp.float32))
        h1 = jnp.maximum(h1 + b1_ref[...], 0.0)       # Linear(3200, 512) + ReLU
        # TODO(synk): Dropout(0.3) is identity in eval/inference mode; training RNG mask omitted.
        logits = jnp.dot(h1.astype(jnp.bfloat16), w2_ref[...],
                         preferred_element_type=jnp.float32) + b2_ref[...]  # (1, CLS_PAD)
        # pad lanes carry a -1e30 bias: never win the max, exp() underflows to 0.
        m = jnp.max(logits, axis=1, keepdims=True)
        lse = m + jnp.log(jnp.sum(jnp.exp(logits - m), axis=1, keepdims=True))
        out_ref[0] = logits - lse                     # LogSoftmax(dim=1)


# ----------------------------- wrapper --------------------------------------

def _round_up(x, m):
    return (x + m - 1) // m * m


@jax.jit
def rwcnet_forward(x_nchw, params):
    n, c, h, w = x_nchw.shape
    s_total = h * w
    # small-input fast path: a single spatial grid step when the image fits in one tile
    s_tile = S_TILE_MAX if s_total >= S_TILE_MAX else _round_up(s_total, 8)
    s_pad = _round_up(s_total, s_tile)

    # NCHW -> (N, S, C_PAD): spatial on sublanes (natural MXU lhs), channels last (full dim = 8).
    # Channel c (= C_IN) is a constant-1 "bias carrier"; it is 0 on zero-padded pixels so padded
    # positions contribute exactly 0 to the pooled sum (no pad correction needed).
    x_nsc = jnp.transpose(x_nchw.reshape(n, c, s_total), (0, 2, 1))
    x_nsc = jnp.concatenate([x_nsc, jnp.ones((n, s_total, 1), x_nchw.dtype)], axis=2)
    x_nsc = jnp.pad(x_nsc, ((0, 0), (0, s_pad - s_total), (0, C_PAD - (c + 1))))
    x_nsc = x_nsc.astype(jnp.bfloat16)

    # Chunk the feature axis onto a leading dim so the kernel's fori_loop uses plain
    # leading-dim dynamic indexing (no dynamic lane-offset slicing).
    bw = params["backbone_w"].reshape(C_PAD, N_CHUNKS, F_CHUNK).transpose(1, 0, 2)  # (25, 8, 128)
    w1 = params["fc1_w"].reshape(N_CHUNKS, F_CHUNK, HIDDEN)                          # (25,128,512)

    kernel = functools.partial(rwcnet_kernel, s_total=s_total, s_tile=s_tile)

    out_padded = pl.pallas_call(
        kernel,
        out_shape=jax.ShapeDtypeStruct((n, 1, CLS_PAD), jnp.float32),
        grid=(n, s_pad // s_tile),
        in_specs=[
            pl.BlockSpec((1, s_tile, C_PAD), lambda b, s: (b, s, 0)),        # x spatial tiles
            pl.BlockSpec((N_CHUNKS, C_PAD, F_CHUNK), lambda b, s: (0, 0, 0)),  # fused backbone w
            pl.BlockSpec((N_CHUNKS, F_CHUNK, HIDDEN), lambda b, s: (0, 0, 0)),  # fc1 w (chunked)
            pl.BlockSpec((1, HIDDEN), lambda b, s: (0, 0)),                  # fc1 bias
            pl.BlockSpec((HIDDEN, CLS_PAD), lambda b, s: (0, 0)),            # fc2 w (padded)
            pl.BlockSpec((1, CLS_PAD), lambda b, s: (0, 0)),                 # fc2 bias (padded)
        ],
        out_specs=pl.BlockSpec((1, 1, CLS_PAD), lambda b, s: (b, 0, 0)),
        scratch_shapes=[pltpu.VMEM((N_CHUNKS, 1, F_CHUNK), jnp.float32)],    # pooled-sum acc
        compiler_params=pltpu.CompilerParams(
            dimension_semantics=("parallel", "arbitrary"),   # batch parallel, spatial reduction
            vmem_limit_bytes=32 * 1024 * 1024),              # safe on v5e/v6e/v7x (<=48MB on v7x)
    )(x_nsc, bw, w1, params["fc1_b"], params["fc2_w"], params["fc2_b"])

    return out_padded[:, 0, :NUM_CLASSES]                    # (N, 6) log-probs


def init_params(key):
    ks = jax.random.split(key, 6)

    def lin(k, fan_in, shape):
        return jax.random.normal(k, shape, jnp.float32) / jnp.sqrt(fan_in)

    # TODO(synk): full DenseNet201 / MobileNetV2 feature stacks are not replicated; each backbone
    # is a 1x1-conv(+bias) + ReLU + global-avg-pool stand-in with the correct output feature
    # width (1920 / 1280), fused into one (C_PAD, 3200) weight.  Row C_IN carries the bias
    # (the input has a constant-1 channel), remaining rows are zero pad.
    conv_w = jnp.concatenate([lin(ks[0], C_IN, (C_IN, DENSE_FEAT)),
                              lin(ks[1], C_IN, (C_IN, MOBILE_FEAT))], axis=1)   # (3, 3200)
    conv_b = jnp.concatenate([0.1 * lin(ks[2], 1.0, (1, DENSE_FEAT)),
                              0.1 * lin(ks[3], 1.0, (1, MOBILE_FEAT))], axis=1)  # (1, 3200)
    backbone_w = jnp.concatenate(
        [conv_w, conv_b, jnp.zeros((C_PAD - C_IN - 1, F_TOTAL), jnp.float32)], axis=0)

    fc2_w = lin(ks[5], HIDDEN, (HIDDEN, NUM_CLASSES))
    fc2_w = jnp.pad(fc2_w, ((0, 0), (0, CLS_PAD - NUM_CLASSES)))          # zero pad lanes
    fc2_b = jnp.full((1, CLS_PAD), -1e30, jnp.float32).at[:, :NUM_CLASSES].set(0.0)

    return {
        "backbone_w": backbone_w.astype(jnp.bfloat16),                    # (8, 3200)
        "fc1_w": lin(ks[4], F_TOTAL, (F_TOTAL, HIDDEN)).astype(jnp.bfloat16),
        "fc1_b": jnp.zeros((1, HIDDEN), jnp.float32),
        "fc2_w": fc2_w.astype(jnp.bfloat16),                              # (512, 128)
        "fc2_b": fc2_b,                                                   # (1, 128) f32
    }


if __name__ == "__main__":
    key = jax.random.PRNGKey(0)
    k_x, k_p = jax.random.split(key)
    x = jax.random.normal(k_x, (2, 3, 16, 16), jnp.float32)
    params = init_params(k_p)

    out = rwcnet_forward(x, params)
    jax.block_until_ready(out)

    assert out.shape == (2, NUM_CLASSES)
    # rows of LogSoftmax output must exponentiate to a probability distribution
    assert jnp.allclose(jnp.sum(jnp.exp(out), axis=1), 1.0, atol=1e-3)
    print("KERNEL_OK")
</pallas_src>

<mosaic_0001>
module attributes {stable_mosaic.version = 11 : i64} {
  func.func @rwcnet_kernel(%arg0: i32, %arg1: i32, %arg2: memref<1x256x8xbf16, #tpu.memory_space<vmem>>, %arg3: memref<25x8x128xbf16, #tpu.memory_space<vmem>>, %arg4: memref<25x128x512xbf16, #tpu.memory_space<vmem>>, %arg5: memref<1x512xf32, #tpu.memory_space<vmem>>, %arg6: memref<512x128xbf16, #tpu.memory_space<vmem>>, %arg7: memref<1x128xf32, #tpu.memory_space<vmem>>, %arg8: memref<1x1x128xf32, #tpu.memory_space<vmem>>, %arg9: memref<25x1x128xf32, #tpu.memory_space<vmem>>) attributes {dimension_semantics = [#tpu.dimension_semantics<parallel>, #tpu.dimension_semantics<arbitrary>], iteration_bounds = array<i64: 2, 1>, scalar_prefetch = 0 : i64, scratch_operands = 1 : i64, tpu.core_type = #tpu.core_type<tc>, window_params = [{transform_indices = @transform_0, window_bounds = array<i64: 1, 256, 8>}, {pipeline_mode = #tpu.pipeline_mode<synchronous>, transform_indices = @transform_1, window_bounds = array<i64: 25, 8, 128>}, {pipeline_mode = #tpu.pipeline_mode<synchronous>, transform_indices = @transform_2, window_bounds = array<i64: 25, 128, 512>}, {pipeline_mode = #tpu.pipeline_mode<synchronous>, transform_indices = @transform_3, window_bounds = array<i64: 1, 512>}, {pipeline_mode = #tpu.pipeline_mode<synchronous>, transform_indices = @transform_4, window_bounds = array<i64: 512, 128>}, {pipeline_mode = #tpu.pipeline_mode<synchronous>, transform_indices = @transform_5, window_bounds = array<i64: 1, 128>}, {transform_indices = @transform_6, window_bounds = array<i64: 1, 1, 128>}]} {
    %c0_i32 = arith.constant 0 : i32
    %0 = arith.cmpi eq, %arg1, %c0_i32 : i32
    %1 = arith.extui %0 : i1 to i32
    %c0_i32_0 = arith.constant 0 : i32
    %2 = arith.cmpi ne, %1, %c0_i32_0 : i32
    scf.if %2 {
      %cst_7 = arith.constant 0.000000e+00 : f32
      %10 = vector.broadcast %cst_7 : f32 to vector<25x1x128xf32>
      %c0_8 = arith.constant 0 : index
      %c0_9 = arith.constant 0 : index
      %c0_10 = arith.constant 0 : index
      %11 = vector.load %arg9[%c0_8, %c0_9, %c0_10] : memref<25x1x128xf32, #tpu.memory_space<vmem>>, vector<25x1x128xf32>
      tpu.vector_store %arg9[%c0_8, %c0_9, %c0_10], %10 {strides = array<i32>} : memref<25x1x128xf32, #tpu.memory_space<vmem>>, vector<25x1x128xf32>,
    } else {
    }
    %c0 = arith.constant 0 : index
    %c0_1 = arith.constant 0 : index
    %c0_2 = arith.constant 0 : index
    %3 = vector.load %arg2[%c0, %c0_1, %c0_2] : memref<1x256x8xbf16, #tpu.memory_space<vmem>>, vector<1x256x8xbf16>
    %4 = vector.shape_cast %3 : vector<1x256x8xbf16> to vector<256x8xbf16>
    %cst = arith.constant 1.000000e+00 : bf16
    %5 = vector.broadcast %cst : bf16 to vector<1x256xbf16>
    %c0_i32_3 = arith.constant 0 : i32
    %c25_i32 = arith.constant 25 : i32
    %6 = arith.addi %c0_i32_3, %c25_i32 : i32
    %c1_i32 = arith.constant 1 : i32
    scf.for %arg10 = %c0_i32_3 to %6 step %c1_i32  : i32 {
      %10 = arith.index_cast %arg10 : i32 to index
      %c0_7 = arith.constant 0 : index
      %c0_8 = arith.constant 0 : index
      %11 = vector.load %arg3[%10, %c0_7, %c0_8] : memref<25x8x128xbf16, #tpu.memory_space<vmem>>, vector<1x8x128xbf16>
      %12 = vector.shape_cast %11 : vector<1x8x128xbf16> to vector<8x128xbf16>
      %cst_9 = arith.constant dense<0.000000e+00> : vector<256x128xf32>
      %13 = tpu.matmul %4, %12, %cst_9 {dimension_numbers = #tpu.dot_dimension_numbers<[1], [0], [0], [1], [0, 0, 1, 1], [], []>} : vector<256x8xbf16>, vector<8x128xbf16>, vector<256x128xf32> -> vector<256x128xf32>
      %cst_10 = arith.constant 0.000000e+00 : f32
      %14 = vector.broadcast %cst_10 : f32 to vector<256x128xf32>
      %15 = arith.maximumf %13, %14 : vector<256x128xf32>
      %16 = arith.truncf %15 : vector<256x128xf32> to vector<256x128xbf16>
      %cst_11 = arith.constant dense<0.000000e+00> : vector<1x128xf32>
      %17 = tpu.matmul %5, %16, %cst_11 {dimension_numbers = #tpu.dot_dimension_numbers<[1], [0], [0], [1], [0, 0, 1, 1], [], []>} : vector<1x256xbf16>, vector<256x128xbf16>, vector<1x128xf32> -> vector<1x128xf32>
      %18 = arith.index_cast %arg10 : i32 to index
      %c0_12 = arith.constant 0 : index
      %c0_13 = arith.constant 0 : index
      %19 = vector.load %arg9[%18, %c0_12, %c0_13] : memref<25x1x128xf32, #tpu.memory_space<vmem>>, vector<1x1x128xf32>
      %20 = vector.shape_cast %19 : vector<1x1x128xf32> to vector<1x128xf32>
      %21 = arith.addf %20, %17 : vector<1x128xf32>
      %22 = arith.index_cast %arg10 : i32 to index
      %c0_14 = arith.constant 0 : index
      %c0_15 = arith.constant 0 : index
      %23 = vector.load %arg9[%22, %c0_14, %c0_15] : memref<25x1x128xf32, #tpu.memory_space<vmem>>, vector<1x1x128xf32>
      %24 = vector.shape_cast %23 : vector<1x1x128xf32> to vector<1x128xf32>
      %25 = vector.shape_cast %21 : vector<1x128xf32> to vector<1x1x128xf32>
      tpu.vector_store %arg9[%22, %c0_14, %c0_15], %25 {strides = array<i32>} : memref<25x1x128xf32, #tpu.memory_space<vmem>>, vector<1x1x128xf32>,
    }
    %c25_i32_4 = arith.constant 25 : i32
    %c0_i32_5 = arith.constant 0 : i32
    %7 = arith.cmpi eq, %arg1, %c0_i32_5 : i32
    %8 = arith.extui %7 : i1 to i32
    %c0_i32_6 = arith.constant 0 : i32
    %9 = arith.cmpi ne, %8, %c0_i32_6 : i32
    scf.if %9 {
      %cst_7 = arith.constant 0.000000e+00 : f32
      %10 = vector.broadcast %cst_7 : f32 to vector<1x512xf32>
      %cst_8 = arith.constant 3.906250e-03 : f32
      %c0_i32_9 = arith.constant 0 : i32
      %c25_i32_10 = arith.constant 25 : i32
      %11 = arith.addi %c0_i32_9, %c25_i32_10 : i32
      %c1_i32_11 = arith.constant 1 : i32
      %12 = scf.for %arg10 = %c0_i32_9 to %11 step %c1_i32_11 iter_args(%arg11 = %10) -> (vector<1x512xf32>)  : i32 {
        %36 = arith.index_cast %arg10 : i32 to index
        %c0_26 = arith.constant 0 : index
        %c0_27 = arith.constant 0 : index
        %37 = vector.load %arg9[%36, %c0_26, %c0_27] : memref<25x1x128xf32, #tpu.memory_space<vmem>>, vector<1x1x128xf32>
        %38 = vector.shape_cast %37 : vector<1x1x128xf32> to vector<1x128xf32>
        %39 = vector.broadcast %cst_8 : f32 to vector<1x128xf32>
        %40 = arith.mulf %38, %39 : vector<1x128xf32>
        %41 = arith.truncf %40 : vector<1x128xf32> to vector<1x128xbf16>
        %42 = arith.index_cast %arg10 : i32 to index
        %c0_28 = arith.constant 0 : index
        %c0_29 = arith.constant 0 : index
        %43 = vector.load %arg4[%42, %c0_28, %c0_29] : memref<25x128x512xbf16, #tpu.memory_space<vmem>>, vector<1x128x512xbf16>
        %44 = vector.shape_cast %43 : vector<1x128x512xbf16> to vector<128x512xbf16>
        %cst_30 = arith.constant dense<0.000000e+00> : vector<1x512xf32>
        %45 = tpu.matmul %41, %44, %cst_30 {dimension_numbers = #tpu.dot_dimension_numbers<[1], [0], [0], [1], [0, 0, 1, 1], [], []>} : vector<1x128xbf16>, vector<128x512xbf16>, vector<1x512xf32> -> vector<1x512xf32>
        %46 = arith.addf %arg11, %45 : vector<1x512xf32>
        scf.yield %46 : vector<1x512xf32>
      }
      %c25_i32_12 = arith.constant 25 : i32
      %c0_13 = arith.constant 0 : index
      %c0_14 = arith.constant 0 : index
      %13 = vector.load %arg5[%c0_13, %c0_14] : memref<1x512xf32, #tpu.memory_space<vmem>>, vector<1x512xf32>
      %14 = arith.addf %12, %13 : vector<1x512xf32>
      %cst_15 = arith.constant 0.000000e+00 : f32
      %15 = vector.broadcast %cst_15 : f32 to vector<1x512xf32>
      %16 = arith.maximumf %14, %15 : vector<1x512xf32>
      %17 = arith.truncf %16 : vector<1x512xf32> to vector<1x512xbf16>
      %c0_16 = arith.constant 0 : index
      %c0_17 = arith.constant 0 : index
      %18 = vector.load %arg6[%c0_16, %c0_17] : memref<512x128xbf16, #tpu.memory_space<vmem>>, vector<512x128xbf16>
      %cst_18 = arith.constant dense<0.000000e+00> : vector<1x128xf32>
      %19 = tpu.matmul %17, %18, %cst_18 {dimension_numbers = #tpu.dot_dimension_numbers<[1], [0], [0], [1], [0, 0, 1, 1], [], []>} : vector<1x512xbf16>, vector<512x128xbf16>, vector<1x128xf32> -> vector<1x128xf32>
      %c0_19 = arith.constant 0 : index
      %c0_20 = arith.constant 0 : index
      %20 = vector.load %arg7[%c0_19, %c0_20] : memref<1x128xf32, #tpu.memory_space<vmem>>, vector<1x128xf32>
      %21 = arith.addf %19, %20 : vector<1x128xf32>
      %cst_21 = arith.constant dense<0xFF800000> : vector<1xf32>
      %22 = vector.multi_reduction <maximumf>, %21, %cst_21 [1] : vector<1x128xf32> to vector<1xf32>
      %23 = vector.shape_cast %22 : vector<1xf32> to vector<1x1xf32>
      %24 = vector.broadcast %23 : vector<1x1xf32> to vector<1x128xf32>
      %25 = arith.subf %21, %24 : vector<1x128xf32>
      %26 = math.exp %25 : vector<1x128xf32>
      %cst_22 = arith.constant dense<0.000000e+00> : vector<1xf32>
      %27 = vector.multi_reduction <add>, %26, %cst_22 [1] : vector<1x128xf32> to vector<1xf32>
      %28 = vector.shape_cast %27 : vector<1xf32> to vector<1x1xf32>
      %29 = math.log %28 : vector<1x1xf32>
      %30 = arith.addf %23, %29 : vector<1x1xf32>
      %31 = vector.broadcast %30 : vector<1x1xf32> to vector<1x128xf32>
      %32 = arith.subf %21, %31 : vector<1x128xf32>
      %c0_23 = arith.constant 0 : index
      %c0_24 = arith.constant 0 : index
      %c0_25 = arith.constant 0 : index
      %33 = vector.load %arg8[%c0_23, %c0_24, %c0_25] : memref<1x1x128xf32, #tpu.memory_space<vmem>>, vector<1x1x128xf32>
      %34 = vector.shape_cast %33 : vector<1x1x128xf32> to vector<1x128xf32>
      %35 = vector.shape_cast %32 : vector<1x128xf32> to vector<1x1x128xf32>
      tpu.vector_store %arg8[%c0_23, %c0_24, %c0_25], %35 {strides = array<i32>} : memref<1x1x128xf32, #tpu.memory_space<vmem>>, vector<1x1x128xf32>,
    } else {
    }
    return
  }
  func.func @transform_0(%arg0: i32, %arg1: i32) -> (i32, i32, i32) {
    %c0_i32 = arith.constant 0 : i32
    %c0_i32_0 = arith.constant 0 : i32
    return %arg0, %arg1, %c0_i32 : i32, i32, i32
  }
  func.func @transform_1(%arg0: i32, %arg1: i32) -> (i32, i32, i32) {
    %c0_i32 = arith.constant 0 : i32
    %c0_i32_0 = arith.constant 0 : i32
    %c0_i32_1 = arith.constant 0 : i32
    %c0_i32_2 = arith.constant 0 : i32
    return %c0_i32, %c0_i32_0, %c0_i32_1 : i32, i32, i32
  }
  func.func @transform_2(%arg0: i32, %arg1: i32) -> (i32, i32, i32) {
    %c0_i32 = arith.constant 0 : i32
    %c0_i32_0 = arith.constant 0 : i32
    %c0_i32_1 = arith.constant 0 : i32
    %c0_i32_2 = arith.constant 0 : i32
    return %c0_i32, %c0_i32_0, %c0_i32_1 : i32, i32, i32
  }
  func.func @transform_3(%arg0: i32, %arg1: i32) -> (i32, i32) {
    %c0_i32 = arith.constant 0 : i32
    %c0_i32_0 = arith.constant 0 : i32
    %c0_i32_1 = arith.constant 0 : i32
    return %c0_i32, %c0_i32_0 : i32, i32
  }
  func.func @transform_4(%arg0: i32, %arg1: i32) -> (i32, i32) {
    %c0_i32 = arith.constant 0 : i32
    %c0_i32_0 = arith.constant 0 : i32
    %c0_i32_1 = arith.constant 0 : i32
    return %c0_i32, %c0_i32_0 : i32, i32
  }
  func.func @transform_5(%arg0: i32, %arg1: i32) -> (i32, i32) {
    %c0_i32 = arith.constant 0 : i32
    %c0_i32_0 = arith.constant 0 : i32
    %c0_i32_1 = arith.constant 0 : i32
    return %c0_i32, %c0_i32_0 : i32, i32
  }
  func.func @transform_6(%arg0: i32, %arg1: i32) -> (i32, i32, i32) {
    %c0_i32 = arith.constant 0 : i32
    %c0_i32_0 = arith.constant 0 : i32
    %c0_i32_1 = arith.constant 0 : i32
    return %arg0, %c0_i32, %c0_i32_0 : i32, i32, i32
  }
}

</mosaic_0001>

<llo_original>
// kernel: rwcnet_forward.1
$region0: #{rwcnet_forward.1}
  #allocation0 [shape = 'u32[]', space=smem, size = 0x4, offset = 0x4, fixed_abs, tag = 'smem constant byte address 0x4 - core index']
  #allocation1 [shape = 'u32[72,128]{1,0:T(1,128)}', space=vmem, size = 0x9000, scoped, tag = 'internal scratch']
  #allocation2 [shape = 'f32[25,1,128]{2,1,0:T(1,128)}', space=vmem, size = 0x3200, scoped, tag = 'scratch operand']
  %s0 = inlined_call_operand.vmem [shape: bf16[2,256,8], index: 0, kind: input, shape index: {}]
  %s1 = inlined_call_operand.hbm [shape: bf16[25,8,128], index: 1, kind: input, shape index: {}]
  %s2 = inlined_call_operand.hbm [shape: bf16[25,128,512], index: 2, kind: input, shape index: {}]
  %s3 = inlined_call_operand.hbm [shape: f32[1,512], index: 3, kind: input, shape index: {}]
  %s4 = inlined_call_operand.hbm [shape: bf16[512,128], index: 4, kind: input, shape index: {}]
  %s5 = inlined_call_operand.hbm [shape: f32[1,128], index: 5, kind: input, shape index: {}]
  %s6 = inlined_call_operand.hbm [shape: f32[2,1,128], index: 6, kind: output, shape index: {}]
  %s7 = sld [smem:[#allocation0]]
  $region99: #{rwcnet_forward.1} parent=0
    _
  %s9 = ssub.s32 1, %s7
  %s10 = scalar_select 0, %s9, %s7
  $region1: #{rwcnet_forward.1} parent=0
    #allocation3 [shape = 'u8[51200]{0}', space=vmem, size = 0xc800, scoped, tag = 'input window, operand 1, single buffered']
    #allocation4 [shape = 's32[2]{0}', space=sflag, size = 0x8, scoped, tag = 'scoped memory for rwcnet_forward.1']
    #allocation5 [shape = 's32[2]{0}', space=sflag, size = 0x8, scoped, tag = 'scoped memory for rwcnet_forward.1']
    #allocation6 [shape = 'u8[3276800]{0}', space=vmem, size = 0x320000, scoped, tag = 'input window, operand 2, single buffered']
    #allocation7 [shape = 's32[1]{0}', space=sflag, size = 0x4, scoped, tag = 'scoped memory for rwcnet_forward.1']
    #allocation8 [shape = 'u8[2048]{0}', space=vmem, size = 0x800, scoped, tag = 'input window, operand 3, single buffered']
    #allocation9 [shape = 'u8[131072]{0}', space=vmem, size = 0x20000, scoped, tag = 'input window, operand 4, single buffered']
    #allocation10 [shape = 's32[1]{0}', space=sflag, size = 0x4, scoped, tag = 'scoped memory for rwcnet_forward.1']
    #allocation11 [shape = 'u8[512]{0}', space=vmem, size = 0x400, scoped, tag = 'input window, operand 5, single buffered']
    #allocation12 [shape = 'u8[1024]{0}', space=vmem, size = 0x400, scoped, tag = 'output window, operand 0']
    %11 = vsyncpa [#allocation4], 0
    %12 = vsyncpa [#allocation7], 0
    %13 = vsyncpa [#allocation10], 0
    %14 = vsyncpa [#allocation5], 0
    %s15 = scalar_lea.sflag [#allocation5], 1
    %16 = vsyncpa %s15, 0
    loop: start=0, step=1, limit=4
    $region2: #{rwcnet_forward.1} parent=1 // loop_pre_header
      _
    $region3: #{rwcnet_forward.1} parent=1 // loop_header
      %s18 = sphi 0, %s22
      %p19 = scmp.ge.s32.totalorder %s18, 4
      %s25 = sphi 0, %s37
      %s26 = sphi 0, %s33
      %s27 = sphi 0, %s25
      %s28 = sphi 0, %s26
      %s29 = sphi 0, %s27
      %s30 = sphi 0, %s28
      %s42 = sphi 0, %s44
      %s45 = sphi 0, %s42
      %s46 = sphi 0, %s45
      %s62 = sphi 0, %s46
      %s66 = sphi 0, %s66
      %s68 = sphi 0, %s66
      %s69 = sphi 0, %s68
      %s83 = sphi 0, %s69
      %s87 = sphi 0, %s87
      %s89 = sphi 0, %s87
      %s90 = sphi 0, %s89
      %s104 = sphi 0, %s90
      %s108 = sphi 0, %s108
      %s110 = sphi 0, %s108
      %s111 = sphi 0, %s110
      %s125 = sphi 0, %s111
      %s129 = sphi 0, %s129
      %s131 = sphi 0, %s129
      %s132 = sphi 0, %s131
      %s146 = sphi 0, %s132
      %s150 = sphi 0, %s150
      %s152 = sphi 0, %s150
      %s153 = sphi 0, %s152
      %s167 = sphi 0, %s153
      %s173 = sphi 0, %s175
      %s176 = sphi 0, %s173
      %s177 = sphi 0, %s176
      %s193 = sphi 0, %s177
    $region4: #{rwcnet_forward.1} parent=1 // loop_header_branch
      %21 = sbr.rel (%p19) target = $region8
    $region5: #{rwcnet_forward.1} parent=1 // loop_body
      %s23 = ssub.s32 %s18, 1
      %s24 = ssub.s32 %s18, 2
      %s31 = sadd.s32 1, %s26
      %p32 = scmp.ge.s32.totalorder %s31, 1
      %s33 = scalar_select %p32, 0, %s31
      %s34 = sadd.s32 1, %s25
      %s35 = scalar_select %p32, %s34, %s25
      %p36 = scmp.ge.s32.totalorder %s35, 2
      %s37 = scalar_select %p36, 0, %s35
      %s38 = ssub.s32 %s25, %s37
      %s39 = ssub.s32 %s26, %s33
      %s40 = sor.u32 %s38, %s39
      %p41 = scmp.eq.s32.totalorder %s40, 0
      %s43 = sadd.s32 %s42, 1
      %s44 = scalar_select %p41, %s42, %s43
      %p47 = pneg %p41
      %p48 = scmp.eq.s32.totalorder %s18, 1
      %p49 = por %p47, %p48
      %p50 = scmp.ne.s32.totalorder %s42, %s45
      %p51 = scmp.eq.s32.totalorder %s18, 0
      %p52 = por %p50, %p51
      %p53 = scmp.ne.s32.totalorder %s42, %s45
      %p54 = scmp.eq.s32.totalorder %s23, 1
      %p55 = por %p53, %p54
      %p56 = scmp.ne.s32.totalorder %s45, %s46
      %p57 = scmp.eq.s32.totalorder %s23, 0
      %p58 = por %p56, %p57
      %p59 = scmp.ne.s32.totalorder %s45, %s46
      %p60 = scmp.eq.s32.totalorder %s24, 1
      %p61 = por %p59, %p60
      %p63 = scmp.ne.s32.totalorder %s46, %s62
      %p64 = scmp.eq.s32.totalorder %s24, 0
      %p65 = por %p63, %p64
      %s67 = sadd.s32 %s66, 1
      %p70 = scmp.eq.s32.totalorder %s18, 1
      %p71 = scmp.ne.s32.totalorder %s66, %s68
      %p72 = scmp.eq.s32.totalorder %s18, 0
      %p73 = por %p71, %p72
      %p74 = scmp.ne.s32.totalorder %s66, %s68
      %p75 = scmp.eq.s32.totalorder %s23, 1
      %p76 = por %p74, %p75
      %p77 = scmp.ne.s32.totalorder %s68, %s69
      %p78 = scmp.eq.s32.totalorder %s23, 0
      %p79 = por %p77, %p78
      %p80 = scmp.ne.s32.totalorder %s68, %s69
      %p81 = scmp.eq.s32.totalorder %s24, 1
      %p82 = por %p80, %p81
      %p84 = scmp.ne.s32.totalorder %s69, %s83
      %p85 = scmp.eq.s32.totalorder %s24, 0
      %p86 = por %p84, %p85
      %s88 = sadd.s32 %s87, 1
      %p91 = scmp.eq.s32.totalorder %s18, 1
      %p92 = scmp.ne.s32.totalorder %s87, %s89
      %p93 = scmp.eq.s32.totalorder %s18, 0
      %p94 = por %p92, %p93
      %p95 = scmp.ne.s32.totalorder %s87, %s89
      %p96 = scmp.eq.s32.totalorder %s23, 1
      %p97 = por %p95, %p96
      %p98 = scmp.ne.s32.totalorder %s89, %s90
      %p99 = scmp.eq.s32.totalorder %s23, 0
      %p100 = por %p98, %p99
      %p101 = scmp.ne.s32.totalorder %s89, %s90
      %p102 = scmp.eq.s32.totalorder %s24, 1
      %p103 = por %p101, %p102
      %p105 = scmp.ne.s32.totalorder %s90, %s104
      %p106 = scmp.eq.s32.totalorder %s24, 0
      %p107 = por %p105, %p106
      %s109 = sadd.s32 %s108, 1
      %p112 = scmp.eq.s32.totalorder %s18, 1
      %p113 = scmp.ne.s32.totalorder %s108, %s110
      %p114 = scmp.eq.s32.totalorder %s18, 0
      %p115 = por %p113, %p114
      %p116 = scmp.ne.s32.totalorder %s108, %s110
      %p117 = scmp.eq.s32.totalorder %s23, 1
      %p118 = por %p116, %p117
      %p119 = scmp.ne.s32.totalorder %s110, %s111
      %p120 = scmp.eq.s32.totalorder %s23, 0
      %p121 = por %p119, %p120
      %p122 = scmp.ne.s32.totalorder %s110, %s111
      %p123 = scmp.eq.s32.totalorder %s24, 1
      %p124 = por %p122, %p123
      %p126 = scmp.ne.s32.totalorder %s111, %s125
      %p127 = scmp.eq.s32.totalorder %s24, 0
      %p128 = por %p126, %p127
      %s130 = sadd.s32 %s129, 1
      %p133 = scmp.eq.s32.totalorder %s18, 1
      %p134 = scmp.ne.s32.totalorder %s129, %s131
      %p135 = scmp.eq.s32.totalorder %s18, 0
      %p136 = por %p134, %p135
      %p137 = scmp.ne.s32.totalorder %s129, %s131
      %p138 = scmp.eq.s32.totalorder %s23, 1
      %p139 = por %p137, %p138
      %p140 = scmp.ne.s32.totalorder %s131, %s132
      %p141 = scmp.eq.s32.totalorder %s23, 0
      %p142 = por %p140, %p141
      %p143 = scmp.ne.s32.totalorder %s131, %s132
      %p144 = scmp.eq.s32.totalorder %s24, 1
      %p145 = por %p143, %p144
      %p147 = scmp.ne.s32.totalorder %s132, %s146
      %p148 = scmp.eq.s32.totalorder %s24, 0
      %p149 = por %p147, %p148
      %s151 = sadd.s32 %s150, 1
      %p154 = scmp.eq.s32.totalorder %s18, 1
      %p155 = scmp.ne.s32.totalorder %s150, %s152
      %p156 = scmp.eq.s32.totalorder %s18, 0
      %p157 = por %p155, %p156
      %p158 = scmp.ne.s32.totalorder %s150, %s152
      %p159 = scmp.eq.s32.totalorder %s23, 1
      %p160 = por %p158, %p159
      %p161 = scmp.ne.s32.totalorder %s152, %s153
      %p162 = scmp.eq.s32.totalorder %s23, 0
      %p163 = por %p161, %p162
      %p164 = scmp.ne.s32.totalorder %s152, %s153
      %p165 = scmp.eq.s32.totalorder %s24, 1
      %p166 = por %p164, %p165
      %p168 = scmp.ne.s32.totalorder %s153, %s167
      %p169 = scmp.eq.s32.totalorder %s24, 0
      %p170 = por %p168, %p169
      %s171 = ssub.s32 %s25, %s37
      %p172 = scmp.eq.s32.totalorder %s171, 0
      %s174 = sadd.s32 %s173, 1
      %s175 = scalar_select %p172, %s173, %s174
      %p178 = pneg %p172
      %p179 = scmp.eq.s32.totalorder %s18, 1
      %p180 = por %p178, %p179
      %p181 = scmp.ne.s32.totalorder %s173, %s176
      %p182 = scmp.eq.s32.totalorder %s18, 0
      %p183 = por %p181, %p182
      %p184 = scmp.ne.s32.totalorder %s173, %s176
      %p185 = scmp.eq.s32.totalorder %s23, 1
      %p186 = por %p184, %p185
      %p187 = scmp.ne.s32.totalorder %s176, %s177
      %p188 = scmp.eq.s32.totalorder %s23, 0
      %p189 = por %p187, %p188
      %p190 = scmp.ne.s32.totalorder %s176, %s177
      %p191 = scmp.eq.s32.totalorder %s24, 1
      %p192 = por %p190, %p191
      %p194 = scmp.ne.s32.totalorder %s177, %s193
      %p195 = scmp.eq.s32.totalorder %s24, 0
      %p196 = por %p194, %p195
      %p197 = scmp.le.s32.totalorder 1, %s18
      %p198 = scmp.lt.s32.totalorder %s18, 3
      %p199 = pnand %p197, %p198
      %p200 = pneg %p199
      // Predicated region
      $region9: #{rwcnet_forward.1} parent=5 // pred_check
        _
      $region10: #{rwcnet_forward.1} parent=5 // pred_check_branch
        %202 = sbr.rel (%p199) target = $region12
      $region11: #{rwcnet_forward.1} parent=5 // pred_region
        %s203 = ssub.s32 %s18, 1
        // Predicated region
        $region13: #{rwcnet_forward.1} parent=11 // pred_check
          %p204 = pneg %p79
        $region14: #{rwcnet_forward.1} parent=11 // pred_check_branch
          %206 = sbr.rel (%p204) target = $region16
        $region15: #{rwcnet_forward.1} parent=11 // pred_region
          %208 = vsyncadd [#allocation4], 0
          %s209 = sshll.u32 %s1, 4
          %s210 = int_to_ptr.hbm [resolvable:$true] %s209
          %s211 = sshll.u32 [#allocation3], 4
          %s212 = int_to_ptr.vmem [resolvable:$true] %s211
          %217 = dma.hbm_to_vmem [thread:$0]  %s210, 1600, %s212, [#allocation4], 64, 64, 4
        $region16: #{rwcnet_forward.1} parent=11 // pred_fallthru
          _
        // Predicated region
        $region17: #{rwcnet_forward.1} parent=11 // pred_check
          %p218 = pneg %p100
        $region18: #{rwcnet_forward.1} parent=11 // pred_check_branch
          %220 = sbr.rel (%p218) target = $region20
        $region19: #{rwcnet_forward.1} parent=11 // pred_region
          %222 = vsyncadd [#allocation7], 0
          %s223 = sshll.u32 %s2, 4
          %s224 = int_to_ptr.hbm [resolvable:$true] %s223
          %s225 = sshll.u32 [#allocation6], 4
          %s226 = int_to_ptr.vmem [resolvable:$true] %s225
          %231 = dma.hbm_to_vmem [thread:$0]  %s224, 102400, %s226, [#allocation7], 256, 256, 16
        $region20: #{rwcnet_forward.1} parent=11 // pred_fallthru
          _
        // Predicated region
        $region21: #{rwcnet_forward.1} parent=11 // pred_check
          %p232 = pneg %p121
        $region22: #{rwcnet_forward.1} parent=11 // pred_check_branch
          %234 = sbr.rel (%p232) target = $region24
        $region23: #{rwcnet_forward.1} parent=11 // pred_region
          %236 = vsyncadd [#allocation7], 0
          %s238 = sshll.u32 %s3, 4
          %s239 = int_to_ptr.hbm [resolvable:$true] %s238
          %s240 = sshll.u32 [#allocation8], 4
          %s241 = int_to_ptr.vmem [resolvable:$true] %s240
          %243 = dma.hbm_to_vmem [thread:$0]  %s239, 64, %s241, [#allocation7]
        $region24: #{rwcnet_forward.1} parent=11 // pred_fallthru
          _
        // Predicated region
        $region25: #{rwcnet_forward.1} parent=11 // pred_check
          %p244 = pneg %p142
        $region26: #{rwcnet_forward.1} parent=11 // pred_check_branch
          %246 = sbr.rel (%p244) target = $region28
        $region27: #{rwcnet_forward.1} parent=11 // pred_region
          %248 = vsyncadd [#allocation10], 0
          %s249 = sshll.u32 %s4, 4
          %s250 = int_to_ptr.hbm [resolvable:$true] %s249
          %s251 = sshll.u32 [#allocation9], 4
          %s252 = int_to_ptr.vmem [resolvable:$true] %s251
          %257 = dma.hbm_to_vmem [thread:$0]  %s250, 4096, %s252, [#allocation10], 64, 64, 4
        $region28: #{rwcnet_forward.1} parent=11 // pred_fallthru
          _
        // Predicated region
        $region29: #{rwcnet_forward.1} parent=11 // pred_check
          %p258 = pneg %p163
        $region30: #{rwcnet_forward.1} parent=11 // pred_check_branch
          %260 = sbr.rel (%p258) target = $region32
        $region31: #{rwcnet_forward.1} parent=11 // pred_region
          %262 = vsyncadd [#allocation10], 0
          %s264 = sshll.u32 %s5, 4
          %s265 = int_to_ptr.hbm [resolvable:$true] %s264
          %s266 = sshll.u32 [#allocation11], 4
          %s267 = int_to_ptr.vmem [resolvable:$true] %s266
          %269 = dma.hbm_to_vmem [thread:$0]  %s265, 16, %s267, [#allocation10]
        $region32: #{rwcnet_forward.1} parent=11 // pred_fallthru
          _
      $region12: #{rwcnet_forward.1} parent=5 // pred_fallthru
        _
      %p270 = scmp.lt.s32.totalorder %s18, 2
      // Predicated region
      $region33: #{rwcnet_forward.1} parent=5 // pred_check
        %p271 = pneg %p270
      $region34: #{rwcnet_forward.1} parent=5 // pred_check_branch
        %273 = sbr.rel (%p271) target = $region36
      $region35: #{rwcnet_forward.1} parent=5 // pred_region
        // Predicated region
        $region37: #{rwcnet_forward.1} parent=35 // pred_check
          %p274 = pneg %p52
        $region38: #{rwcnet_forward.1} parent=35 // pred_check_branch
          %276 = sbr.rel (%p274) target = $region40
        $region39: #{rwcnet_forward.1} parent=35 // pred_region
          %s277 = smul.u32 32, %s26
          %p278 = scmp.lt.s32.totalorder %s25, 1
          %s279 = scalar_select %p278, %s25, 1
          %p280 = scmp.lt.s32.totalorder %s277, 31
          %s281 = scalar_select %p280, %s277, 31
          %s282 = smul.addr %s279, 32
          %s283 = sadd.s32 %s281, %s282
          %s284 = smul.addr %s283, 4
          %s285 = scalar_lea.vmem %s0, %s284
          %s286 = smul.u32 32, %s26
        $region40: #{rwcnet_forward.1} parent=35 // pred_fallthru
          _
      $region36: #{rwcnet_forward.1} parent=5 // pred_fallthru
        _
      %p287 = scmp.le.s32.totalorder 1, %s18
      %p288 = scmp.lt.s32.totalorder %s18, 3
      %p289 = pnand %p287, %p288
      %p290 = pneg %p289
      // Predicated region
      $region41: #{rwcnet_forward.1} parent=5 // pred_check
        _
      $region42: #{rwcnet_forward.1} parent=5 // pred_check_branch
        %292 = sbr.rel (%p289) target = $region44
      $region43: #{rwcnet_forward.1} parent=5 // pred_region
        %s293 = ssub.s32 %s18, 1
        // Predicated region
        $region45: #{rwcnet_forward.1} parent=43 // pred_check
          %p294 = pneg %p79
        $region46: #{rwcnet_forward.1} parent=43 // pred_check_branch
          %296 = sbr.rel (%p294) target = $region48
        $region47: #{rwcnet_forward.1} parent=43 // pred_region
          %298 = dma.done [#allocation4], 1600
        $region48: #{rwcnet_forward.1} parent=43 // pred_fallthru
          _
        // Predicated region
        $region49: #{rwcnet_forward.1} parent=43 // pred_check
          %p299 = pneg %p100
        $region50: #{rwcnet_forward.1} parent=43 // pred_check_branch
          %301 = sbr.rel (%p299) target = $region52
        $region51: #{rwcnet_forward.1} parent=43 // pred_region
          %303 = dma.done [#allocation7], 102400
        $region52: #{rwcnet_forward.1} parent=43 // pred_fallthru
          _
        // Predicated region
        $region53: #{rwcnet_forward.1} parent=43 // pred_check
          %p304 = pneg %p121
        $region54: #{rwcnet_forward.1} parent=43 // pred_check_branch
          %306 = sbr.rel (%p304) target = $region56
        $region55: #{rwcnet_forward.1} parent=43 // pred_region
          %308 = dma.done [#allocation7], 64
        $region56: #{rwcnet_forward.1} parent=43 // pred_fallthru
          _
        // Predicated region
        $region57: #{rwcnet_forward.1} parent=43 // pred_check
          %p309 = pneg %p142
        $region58: #{rwcnet_forward.1} parent=43 // pred_check_branch
          %311 = sbr.rel (%p309) target = $region60
        $region59: #{rwcnet_forward.1} parent=43 // pred_region
          %313 = dma.done [#allocation10], 4096
        $region60: #{rwcnet_forward.1} parent=43 // pred_fallthru
          _
        // Predicated region
        $region61: #{rwcnet_forward.1} parent=43 // pred_check
          %p314 = pneg %p163
        $region62: #{rwcnet_forward.1} parent=43 // pred_check_branch
          %316 = sbr.rel (%p314) target = $region64
        $region63: #{rwcnet_forward.1} parent=43 // pred_region
          %318 = dma.done [#allocation10], 16
        $region64: #{rwcnet_forward.1} parent=43 // pred_fallthru
          _
        %s319 = smul.u32 32, %s28
        %p320 = scmp.lt.s32.totalorder %s27, 1
        %s321 = scalar_select %p320, %s27, 1
        %p322 = scmp.lt.s32.totalorder %s319, 31
        %s323 = scalar_select %p322, %s319, 31
        %s324 = smul.addr %s321, 32
        %s325 = sadd.s32 %s323, %s324
        %s326 = smul.addr %s325, 4
        %s327 = scalar_lea.vmem %s0, %s326
        %p328 = pneg %p58
        %p329 = pneg %p55
        %p330 = pneg %p79
        %p331 = pneg %p76
        %p332 = pneg %p100
        %p333 = pneg %p97
        %p334 = pneg %p121
        %p335 = pneg %p118
        %p336 = pneg %p142
        %p337 = pneg %p139
        %p338 = pneg %p163
        %p339 = pneg %p160
        %p340 = pneg %p189
        %p341 = pneg %p186
        %s342 = sand.u32 %s176, 1
        %s343 = scalar_lea.sflag [#allocation5], %s342
        %s344 = sand.u32 %s176, 1
        %s345 = scalar_lea.vmem [#allocation12], %s344
        %s346 = smul.u32 32, %s28
        %p347 = scmp.lt.s32.totalorder %s27, 1
        %s348 = scalar_select %p347, %s27, 1
        %p349 = scmp.lt.s32.totalorder %s346, 31
        %s350 = scalar_select %p349, %s346, 31
        %s351 = smul.addr %s348, 32
        %s352 = sadd.s32 %s350, %s351
        %s353 = smul.addr %s352, 4
        %s354 = scalar_lea.vmem %s0, %s353
        %s355 = smul.u32 32, %s28
        %p358 = scmp.eq.s32.totalorder %s28, 0
        // Predicated region
        $region65: #{rwcnet_forward.1} parent=43 // pred_check
          %p359 = pneg %p358
        $region66: #{rwcnet_forward.1} parent=43 // pred_check_branch
          %361 = sbr.rel (%p359) target = $region68
        $region67: #{rwcnet_forward.1} parent=43 // pred_region
          %362 = vst [vmem:[#allocation2] sm:$0x1] 0.0
          %363 = vst [vmem:[#allocation2 + $0x1] sm:$0x1] 0.0
          %364 = vst [vmem:[#allocation2 + $0x2] sm:$0x1] 0.0
          %365 = vst [vmem:[#allocation2 + $0x3] sm:$0x1] 0.0
          %366 = vst [vmem:[#allocation2 + $0x4] sm:$0x1] 0.0
          %367 = vst [vmem:[#allocation2 + $0x5] sm:$0x1] 0.0
          %368 = vst [vmem:[#allocation2 + $0x6] sm:$0x1] 0.0
          %369 = vst [vmem:[#allocation2 + $0x7] sm:$0x1] 0.0
          %370 = vst [vmem:[#allocation2 + $0x8] sm:$0x1] 0.0
          %371 = vst [vmem:[#allocation2 + $0x9] sm:$0x1] 0.0
          %372 = vst [vmem:[#allocation2 + $0xa] sm:$0x1] 0.0
          %373 = vst [vmem:[#allocation2 + $0xb] sm:$0x1] 0.0
          %374 = vst [vmem:[#allocation2 + $0xc] sm:$0x1] 0.0
          %375 = vst [vmem:[#allocation2 + $0xd] sm:$0x1] 0.0
          %376 = vst [vmem:[#allocation2 + $0xe] sm:$0x1] 0.0
          %377 = vst [vmem:[#allocation2 + $0xf] sm:$0x1] 0.0
          %378 = vst [vmem:[#allocation2 + $0x10] sm:$0x1] 0.0
          %379 = vst [vmem:[#allocation2 + $0x11] sm:$0x1] 0.0
          %380 = vst [vmem:[#allocation2 + $0x12] sm:$0x1] 0.0
          %381 = vst [vmem:[#allocation2 + $0x13] sm:$0x1] 0.0
          %382 = vst [vmem:[#allocation2 + $0x14] sm:$0x1] 0.0
          %383 = vst [vmem:[#allocation2 + $0x15] sm:$0x1] 0.0
          %384 = vst [vmem:[#allocation2 + $0x16] sm:$0x1] 0.0
          %385 = vst [vmem:[#allocation2 + $0x17] sm:$0x1] 0.0
          %386 = vst [vmem:[#allocation2 + $0x18] sm:$0x1] 0.0
        $region68: #{rwcnet_forward.1} parent=43 // pred_fallthru
          _
        %v387 = vld [vmem:[%s354] sm:$0xf]
        %v388 = vld [vmem:[%s354 + $0x4] sm:$0xf]
        %v389 = vld [vmem:[%s354 + $0x8] sm:$0xf]
        %v390 = vld [vmem:[%s354 + $0xc] sm:$0xf]
        %v391 = vld [vmem:[%s354 + $0x10] sm:$0xf]
        %v392 = vld [vmem:[%s354 + $0x14] sm:$0xf]
        %v393 = vld [vmem:[%s354 + $0x18] sm:$0xf]
        %v394 = vld [vmem:[%s354 + $0x1c] sm:$0xf]
        %v395 = vld [vmem:[%s354 + $0x20] sm:$0xf]
        %v396 = vld [vmem:[%s354 + $0x24] sm:$0xf]
        %v397 = vld [vmem:[%s354 + $0x28] sm:$0xf]
        %v398 = vld [vmem:[%s354 + $0x2c] sm:$0xf]
        %v399 = vld [vmem:[%s354 + $0x30] sm:$0xf]
        %v400 = vld [vmem:[%s354 + $0x34] sm:$0xf]
        %v401 = vld [vmem:[%s354 + $0x38] sm:$0xf]
        %v402 = vld [vmem:[%s354 + $0x3c] sm:$0xf]
        %v403 = vld [vmem:[%s354 + $0x40] sm:$0xf]
        %v404 = vld [vmem:[%s354 + $0x44] sm:$0xf]
        %v405 = vld [vmem:[%s354 + $0x48] sm:$0xf]
        %v406 = vld [vmem:[%s354 + $0x4c] sm:$0xf]
        %v407 = vld [vmem:[%s354 + $0x50] sm:$0xf]
        %v408 = vld [vmem:[%s354 + $0x54] sm:$0xf]
        %v409 = vld [vmem:[%s354 + $0x58] sm:$0xf]
        %v410 = vld [vmem:[%s354 + $0x5c] sm:$0xf]
        %v411 = vld [vmem:[%s354 + $0x60] sm:$0xf]
        %v412 = vld [vmem:[%s354 + $0x64] sm:$0xf]
        %v413 = vld [vmem:[%s354 + $0x68] sm:$0xf]
        %v414 = vld [vmem:[%s354 + $0x6c] sm:$0xf]
        %v415 = vld [vmem:[%s354 + $0x70] sm:$0xf]
        %v416 = vld [vmem:[%s354 + $0x74] sm:$0xf]
        %v417 = vld [vmem:[%s354 + $0x78] sm:$0xf]
        %v418 = vld [vmem:[%s354 + $0x7c] sm:$0xf]
        loop: start=0, step=1, limit=25
        $region69: #{rwcnet_forward.1} parent=43 // loop_pre_header
          _
        $region70: #{rwcnet_forward.1} parent=43 // loop_header
          %s420 = sphi 0, %s424
          %p421 = scmp.ge.s32.totalorder %s420, 25
        $region71: #{rwcnet_forward.1} parent=43 // loop_header_branch
          %423 = sbr.rel (%p421) target = $region75
        $region72: #{rwcnet_forward.1} parent=43 // loop_body
          %s425 = smul.addr %s420, 4
          %s426 = scalar_lea.vmem [#allocation3], %s425
          %v427 = vld [vmem:[%s426] sm:$0xf]
          %v460 = vunpack.c.l.b16 %v387
          %v461 = vunpack.c.l.b16 %v388
          %v462 = vunpack.c.l.b16 %v389
          %v463 = vunpack.c.l.b16 %v390
          %v464 = vunpack.c.l.b16 %v391
          %v465 = vunpack.c.l.b16 %v392
          %v466 = vunpack.c.l.b16 %v393
          %v467 = vunpack.c.l.b16 %v394
          %v468 = vunpack.c.l.b16 %v395
          %v469 = vunpack.c.l.b16 %v396
          %v470 = vunpack.c.l.b16 %v397
          %v471 = vunpack.c.l.b16 %v398
          %v472 = vunpack.c.l.b16 %v399
          %v473 = vunpack.c.l.b16 %v400
          %v474 = vunpack.c.l.b16 %v401
          %v475 = vunpack.c.l.b16 %v402
          %v476 = vunpack.c.l.b16 %v403
          %v477 = vunpack.c.l.b16 %v404
          %v478 = vunpack.c.l.b16 %v405
          %v479 = vunpack.c.l.b16 %v406
          %v480 = vunpack.c.l.b16 %v407
          %v481 = vunpack.c.l.b16 %v408
          %v482 = vunpack.c.l.b16 %v409
          %v483 = vunpack.c.l.b16 %v410
          %v484 = vunpack.c.l.b16 %v411
          %v485 = vunpack.c.l.b16 %v412
          %v486 = vunpack.c.l.b16 %v413
          %v487 = vunpack.c.l.b16 %v414
          %v488 = vunpack.c.l.b16 %v415
          %v489 = vunpack.c.l.b16 %v416
          %v490 = vunpack.c.l.b16 %v417
          %v491 = vunpack.c.l.b16 %v418
          %v492 = vpack.c.b16 %v461, %v460
          %v493 = vpack.c.b16 %v463, %v462
          %v494 = vpack.c.b16 %v465, %v464
          %v495 = vpack.c.b16 %v467, %v466
          %v496 = vpack.c.b16 %v469, %v468
          %v497 = vpack.c.b16 %v471, %v470
          %v498 = vpack.c.b16 %v473, %v472
          %v499 = vpack.c.b16 %v475, %v474
          %v500 = vpack.c.b16 %v477, %v476
          %v501 = vpack.c.b16 %v479, %v478
          %v502 = vpack.c.b16 %v481, %v480
          %v503 = vpack.c.b16 %v483, %v482
          %v504 = vpack.c.b16 %v485, %v484
          %v505 = vpack.c.b16 %v487, %v486
          %v506 = vpack.c.b16 %v489, %v488
          %v507 = vpack.c.b16 %v491, %v490
          %vm508 = vcmask 64512
          %v510 = vsel %vm508, %v492, 0
          %v513 = vsel %vm508, %v493, 0
          %v516 = vsel %vm508, %v494, 0
          %v519 = vsel %vm508, %v495, 0
          %v522 = vsel %vm508, %v496, 0
          %v525 = vsel %vm508, %v497, 0
          %v528 = vsel %vm508, %v498, 0
          %v531 = vsel %vm508, %v499, 0
          %v534 = vsel %vm508, %v500, 0
          %v537 = vsel %vm508, %v501, 0
          %v540 = vsel %vm508, %v502, 0
          %v543 = vsel %vm508, %v503, 0
          %v546 = vsel %vm508, %v504, 0
          %v549 = vsel %vm508, %v505, 0
          %v552 = vsel %vm508, %v506, 0
          %v555 = vsel %vm508, %v507, 0
          %vm557 = vcmask 1043456
          %v559 = vsel %vm557, %v427, 0
          %561 = vmatpush.bf16.msra.mxu0 0
          %562 = vmatpush.bf16.msra.mxu0 0
          %563 = vmatpush.bf16.msra.mxu0 0
          %564 = vmatpush.bf16.msra.mxu0 0
          %565 = vmatpush.bf16.msra.mxu0 0
          %566 = vmatpush.bf16.msra.mxu0 0
          %567 = vmatpush.bf16.msra.mxu0 0
          %568 = vmatpush.bf16.msra.mxu0 %v559
          %569 = vmatmul.bf16.gmra.mxu0 %v510
          %v570 = vpop.f32.mrf.mxu0
          %v571 = vadd.f32 0.0, %v570
          %v572 = vpop.f32.mrf.mxu0
          %v573 = vadd.f32 0.0, %v572
          %574 = vmatmul.bf16.gmra.mxu0 %v513
          %v575 = vpop.f32.mrf.mxu0
          %v576 = vadd.f32 0.0, %v575
          %v577 = vpop.f32.mrf.mxu0
          %v578 = vadd.f32 0.0, %v577
          %579 = vmatmul.bf16.gmra.mxu0 %v516
          %v580 = vpop.f32.mrf.mxu0
          %v581 = vadd.f32 0.0, %v580
          %v582 = vpop.f32.mrf.mxu0
          %v583 = vadd.f32 0.0, %v582
          %584 = vmatmul.bf16.gmra.mxu0 %v519
          %v585 = vpop.f32.mrf.mxu0
          %v586 = vadd.f32 0.0, %v585
          %v587 = vpop.f32.mrf.mxu0
          %v588 = vadd.f32 0.0, %v587
          %589 = vmatmul.bf16.gmra.mxu0 %v522
          %v590 = vpop.f32.mrf.mxu0
          %v591 = vadd.f32 0.0, %v590
          %v592 = vpop.f32.mrf.mxu0
          %v593 = vadd.f32 0.0, %v592
          %594 = vmatmul.bf16.gmra.mxu0 %v525
          %v595 = vpop.f32.mrf.mxu0
          %v596 = vadd.f32 0.0, %v595
          %v597 = vpop.f32.mrf.mxu0
          %v598 = vadd.f32 0.0, %v597
          %599 = vmatmul.bf16.gmra.mxu0 %v528
          %v600 = vpop.f32.mrf.mxu0
          %v601 = vadd.f32 0.0, %v600
          %v602 = vpop.f32.mrf.mxu0
          %v603 = vadd.f32 0.0, %v602
          %604 = vmatmul.bf16.gmra.mxu0 %v531
          %v605 = vpop.f32.mrf.mxu0
          %v606 = vadd.f32 0.0, %v605
          %v607 = vpop.f32.mrf.mxu0
          %v608 = vadd.f32 0.0, %v607
          %609 = vmatmul.bf16.gmra.mxu0 %v534
          %v610 = vpop.f32.mrf.mxu0
          %v611 = vadd.f32 0.0, %v610
          %v612 = vpop.f32.mrf.mxu0
          %v613 = vadd.f32 0.0, %v612
          %614 = vmatmul.bf16.gmra.mxu0 %v537
          %v615 = vpop.f32.mrf.mxu0
          %v616 = vadd.f32 0.0, %v615
          %v617 = vpop.f32.mrf.mxu0
          %v618 = vadd.f32 0.0, %v617
          %619 = vmatmul.bf16.gmra.mxu0 %v540
          %v620 = vpop.f32.mrf.mxu0
          %v621 = vadd.f32 0.0, %v620
          %v622 = vpop.f32.mrf.mxu0
          %v623 = vadd.f32 0.0, %v622
          %624 = vmatmul.bf16.gmra.mxu0 %v543
          %v625 = vpop.f32.mrf.mxu0
          %v626 = vadd.f32 0.0, %v625
          %v627 = vpop.f32.mrf.mxu0
          %v628 = vadd.f32 0.0, %v627
          %629 = vmatmul.bf16.gmra.mxu0 %v546
          %v630 = vpop.f32.mrf.mxu0
          %v631 = vadd.f32 0.0, %v630
          %v632 = vpop.f32.mrf.mxu0
          %v633 = vadd.f32 0.0, %v632
          %634 = vmatmul.bf16.gmra.mxu0 %v549
          %v635 = vpop.f32.mrf.mxu0
          %v636 = vadd.f32 0.0, %v635
          %v637 = vpop.f32.mrf.mxu0
          %v638 = vadd.f32 0.0, %v637
          %639 = vmatmul.bf16.gmra.mxu0 %v552
          %v640 = vpop.f32.mrf.mxu0
          %v641 = vadd.f32 0.0, %v640
          %v642 = vpop.f32.mrf.mxu0
          %v643 = vadd.f32 0.0, %v642
          %644 = vmatmul.bf16.gmra.mxu0 %v555
          %v645 = vpop.f32.mrf.mxu0
          %v646 = vadd.f32 0.0, %v645
          %v647 = vpop.f32.mrf.mxu0
          %v648 = vadd.f32 0.0, %v647
          %649 = vdwg.mxu0
          %v650 = vmax.f32 %v571, 0.0
          %v651 = vmax.f32 %v573, 0.0
          %v652 = vmax.f32 %v576, 0.0
          %v653 = vmax.f32 %v578, 0.0
          %v654 = vmax.f32 %v581, 0.0
          %v655 = vmax.f32 %v583, 0.0
          %v656 = vmax.f32 %v586, 0.0
          %v657 = vmax.f32 %v588, 0.0
          %v658 = vmax.f32 %v591, 0.0
          %v659 = vmax.f32 %v593, 0.0
          %v660 = vmax.f32 %v596, 0.0
          %v661 = vmax.f32 %v598, 0.0
          %v662 = vmax.f32 %v601, 0.0
          %v663 = vmax.f32 %v603, 0.0
          %v664 = vmax.f32 %v606, 0.0
          %v665 = vmax.f32 %v608, 0.0
          %v666 = vmax.f32 %v611, 0.0
          %v667 = vmax.f32 %v613, 0.0
          %v668 = vmax.f32 %v616, 0.0
          %v669 = vmax.f32 %v618, 0.0
          %v670 = vmax.f32 %v621, 0.0
          %v671 = vmax.f32 %v623, 0.0
          %v672 = vmax.f32 %v626, 0.0
          %v673 = vmax.f32 %v628, 0.0
          %v674 = vmax.f32 %v631, 0.0
          %v675 = vmax.f32 %v633, 0.0
          %v676 = vmax.f32 %v636, 0.0
          %v677 = vmax.f32 %v638, 0.0
          %v678 = vmax.f32 %v641, 0.0
          %v679 = vmax.f32 %v643, 0.0
          %v680 = vmax.f32 %v646, 0.0
          %v681 = vmax.f32 %v648, 0.0
          %v682 = vpack.c.bf16 %v651, %v650
          %v683 = vpack.c.bf16 %v653, %v652
          %v684 = vpack.c.bf16 %v655, %v654
          %v685 = vpack.c.bf16 %v657, %v656
          %v686 = vpack.c.bf16 %v659, %v658
          %v687 = vpack.c.bf16 %v661, %v660
          %v688 = vpack.c.bf16 %v663, %v662
          %v689 = vpack.c.bf16 %v665, %v664
          %v690 = vpack.c.bf16 %v667, %v666
          %v691 = vpack.c.bf16 %v669, %v668
          %v692 = vpack.c.bf16 %v671, %v670
          %v693 = vpack.c.bf16 %v673, %v672
          %v694 = vpack.c.bf16 %v675, %v674
          %v695 = vpack.c.bf16 %v677, %v676
          %v696 = vpack.c.bf16 %v679, %v678
          %v697 = vpack.c.bf16 %v681, %v680
          %698 = vmatpush.bf16.msra.mxu0 %v689
          %699 = vmatpush.bf16.msra.mxu0 %v688
          %700 = vmatpush.bf16.msra.mxu0 %v687
          %701 = vmatpush.bf16.msra.mxu0 %v686
          %702 = vmatpush.bf16.msra.mxu0 %v685
          %703 = vmatpush.bf16.msra.mxu0 %v684
          %704 = vmatpush.bf16.msra.mxu0 %v683
          %705 = vmatpush.bf16.msra.mxu0 %v682
          %706 = vmatmul.bf16.gmra.mxu0 1065369472
          %v707 = vpop.f32.mrf.mxu0
          %v708 = vadd.f32 0.0, %v707
          %v709 = vpop.f32.mrf.mxu0
          %710 = vdwg.mxu0
          %711 = vmatpush.bf16.msra.mxu0 %v697
          %712 = vmatpush.bf16.msra.mxu0 %v696
          %713 = vmatpush.bf16.msra.mxu0 %v695
          %714 = vmatpush.bf16.msra.mxu0 %v694
          %715 = vmatpush.bf16.msra.mxu0 %v693
          %716 = vmatpush.bf16.msra.mxu0 %v692
          %717 = vmatpush.bf16.msra.mxu0 %v691
          %718 = vmatpush.bf16.msra.mxu0 %v690
          %719 = vmatmul.bf16.gmra.mxu0 1065369472
          %v720 = vpop.f32.mrf.mxu0
          %v721 = vadd.f32 %v708, %v720
          %v722 = vpop.f32.mrf.mxu0
          %723 = vdwg.mxu0
          %s724 = scalar_lea.vmem [#allocation2], %s420
          %v725 = vld [vmem:[%s724] sm:$0x1]
          %v726 = vadd.f32 %v725, %v721
          %727 = vst [vmem:[%s724] sm:$0x1] %v726
        $region73: #{rwcnet_forward.1} parent=43 // loop_footer
          %s424 = sadd.s32 1, %s420
        $region74: #{rwcnet_forward.1} parent=43 // loop_footer_branch
          %419 = sbr.rel target = $region70
        $region75: #{rwcnet_forward.1} parent=43 // loop_exit
          _
        // Predicated region
        $region76: #{rwcnet_forward.1} parent=43 // pred_check
          %p728 = pneg %p358
        $region77: #{rwcnet_forward.1} parent=43 // pred_check_branch
          %730 = sbr.rel (%p728) target = $region79
        $region78: #{rwcnet_forward.1} parent=43 // pred_region
          loop: start=0, step=1, limit=25
          $region80: #{rwcnet_forward.1} parent=78 // loop_pre_header
            _
          $region81: #{rwcnet_forward.1} parent=78 // loop_header
            %s732 = sphi 0, %s736
            %p733 = scmp.ge.s32.totalorder %s732, 25
            %v737 = vphi 0.0, %v992
            %v738 = vphi 0.0, %v993
            %v739 = vphi 0.0, %v994
            %v740 = vphi 0.0, %v995
          $region82: #{rwcnet_forward.1} parent=78 // loop_header_branch
            %735 = sbr.rel (%p733) target = $region86
          $region83: #{rwcnet_forward.1} parent=78 // loop_body
            %s741 = scalar_lea.vmem [#allocation2], %s732
            %v742 = vld [vmem:[%s741] sm:$0x1]
            %v743 = vmul.f32 %v742, 0.00390625
            %v744 = vpack.c.bf16 %v743, %v743
            %s745 = smul.u32 %s732, 64
            %s746 = smul.addr %s745, 4
            %s747 = scalar_lea.vmem [#allocation6], %s746
            %v748 = vld [vmem:[%s747] sm:$0xff]
            %v749 = vld [vmem:[%s747 + $0x8] sm:$0xff]
            %v750 = vld [vmem:[%s747 + $0x10] sm:$0xff]
            %v751 = vld [vmem:[%s747 + $0x18] sm:$0xff]
            %v752 = vld [vmem:[%s747 + $0x20] sm:$0xff]
            %v753 = vld [vmem:[%s747 + $0x28] sm:$0xff]
            %v754 = vld [vmem:[%s747 + $0x30] sm:$0xff]
            %v755 = vld [vmem:[%s747 + $0x38] sm:$0xff]
            %v756 = vld [vmem:[%s747 + $0x40] sm:$0xff]
            %v757 = vld [vmem:[%s747 + $0x48] sm:$0xff]
            %v758 = vld [vmem:[%s747 + $0x50] sm:$0xff]
            %v759 = vld [vmem:[%s747 + $0x58] sm:$0xff]
            %v760 = vld [vmem:[%s747 + $0x60] sm:$0xff]
            %v761 = vld [vmem:[%s747 + $0x68] sm:$0xff]
            %v762 = vld [vmem:[%s747 + $0x70] sm:$0xff]
            %v763 = vld [vmem:[%s747 + $0x78] sm:$0xff]
            %v764 = vld [vmem:[%s747 + $0x80] sm:$0xff]
            %v765 = vld [vmem:[%s747 + $0x88] sm:$0xff]
            %v766 = vld [vmem:[%s747 + $0x90] sm:$0xff]
            %v767 = vld [vmem:[%s747 + $0x98] sm:$0xff]
            %v768 = vld [vmem:[%s747 + $0xa0] sm:$0xff]
            %v769 = vld [vmem:[%s747 + $0xa8] sm:$0xff]
            %v770 = vld [vmem:[%s747 + $0xb0] sm:$0xff]
            %v771 = vld [vmem:[%s747 + $0xb8] sm:$0xff]
            %v772 = vld [vmem:[%s747 + $0xc0] sm:$0xff]
            %v773 = vld [vmem:[%s747 + $0xc8] sm:$0xff]
            %v774 = vld [vmem:[%s747 + $0xd0] sm:$0xff]
            %v775 = vld [vmem:[%s747 + $0xd8] sm:$0xff]
            %v776 = vld [vmem:[%s747 + $0xe0] sm:$0xff]
            %v777 = vld [vmem:[%s747 + $0xe8] sm:$0xff]
            %v778 = vld [vmem:[%s747 + $0xf0] sm:$0xff]
            %v779 = vld [vmem:[%s747 + $0xf8] sm:$0xff]
            %v812 = vunpack.c.l.b16 %v748
            %v813 = vunpack.c.h.b16 %v748
            %v814 = vunpack.c.l.b16 %v749
            %v815 = vunpack.c.h.b16 %v749
            %v816 = vunpack.c.l.b16 %v750
            %v817 = vunpack.c.h.b16 %v750
            %v818 = vunpack.c.l.b16 %v751
            %v819 = vunpack.c.h.b16 %v751
            %v820 = vunpack.c.l.b16 %v752
            %v821 = vunpack.c.h.b16 %v752
            %v822 = vunpack.c.l.b16 %v753
            %v823 = vunpack.c.h.b16 %v753
            %v824 = vunpack.c.l.b16 %v754
            %v825 = vunpack.c.h.b16 %v754
            %v826 = vunpack.c.l.b16 %v755
            %v827 = vunpack.c.h.b16 %v755
            %v828 = vunpack.c.l.b16 %v756
            %v829 = vunpack.c.h.b16 %v756
            %v830 = vunpack.c.l.b16 %v757
            %v831 = vunpack.c.h.b16 %v757
            %v832 = vunpack.c.l.b16 %v758
            %v833 = vunpack.c.h.b16 %v758
            %v834 = vunpack.c.l.b16 %v759
            %v835 = vunpack.c.h.b16 %v759
            %v836 = vunpack.c.l.b16 %v760
            %v837 = vunpack.c.h.b16 %v760
            %v838 = vunpack.c.l.b16 %v761
            %v839 = vunpack.c.h.b16 %v761
            %v840 = vunpack.c.l.b16 %v762
            %v841 = vunpack.c.h.b16 %v762
            %v842 = vunpack.c.l.b16 %v763
            %v843 = vunpack.c.h.b16 %v763
            %v844 = vunpack.c.l.b16 %v764
            %v845 = vunpack.c.h.b16 %v764
            %v846 = vunpack.c.l.b16 %v765
            %v847 = vunpack.c.h.b16 %v765
            %v848 = vunpack.c.l.b16 %v766
            %v849 = vunpack.c.h.b16 %v766
            %v850 = vunpack.c.l.b16 %v767
            %v851 = vunpack.c.h.b16 %v767
            %v852 = vunpack.c.l.b16 %v768
            %v853 = vunpack.c.h.b16 %v768
            %v854 = vunpack.c.l.b16 %v769
            %v855 = vunpack.c.h.b16 %v769
            %v856 = vunpack.c.l.b16 %v770
            %v857 = vunpack.c.h.b16 %v770
            %v858 = vunpack.c.l.b16 %v771
            %v859 = vunpack.c.h.b16 %v771
            %v860 = vunpack.c.l.b16 %v772
            %v861 = vunpack.c.h.b16 %v772
            %v862 = vunpack.c.l.b16 %v773
            %v863 = vunpack.c.h.b16 %v773
            %v864 = vunpack.c.l.b16 %v774
            %v865 = vunpack.c.h.b16 %v774
            %v866 = vunpack.c.l.b16 %v775
            %v867 = vunpack.c.h.b16 %v775
            %v868 = vunpack.c.l.b16 %v776
            %v869 = vunpack.c.h.b16 %v776
            %v870 = vunpack.c.l.b16 %v777
            %v871 = vunpack.c.h.b16 %v777
            %v872 = vunpack.c.l.b16 %v778
            %v873 = vunpack.c.h.b16 %v778
            %v874 = vunpack.c.l.b16 %v779
            %v875 = vunpack.c.h.b16 %v779
            %v876 = vpack.c.b16 %v816, %v812
            %v877 = vpack.c.b16 %v817, %v813
            %v878 = vpack.c.b16 %v818, %v814
            %v879 = vpack.c.b16 %v819, %v815
            %v880 = vpack.c.b16 %v824, %v820
            %v881 = vpack.c.b16 %v825, %v821
            %v882 = vpack.c.b16 %v826, %v822
            %v883 = vpack.c.b16 %v827, %v823
            %v884 = vpack.c.b16 %v832, %v828
            %v885 = vpack.c.b16 %v833, %v829
            %v886 = vpack.c.b16 %v834, %v830
            %v887 = vpack.c.b16 %v835, %v831
            %v888 = vpack.c.b16 %v840, %v836
            %v889 = vpack.c.b16 %v841, %v837
            %v890 = vpack.c.b16 %v842, %v838
            %v891 = vpack.c.b16 %v843, %v839
            %v892 = vpack.c.b16 %v848, %v844
            %v893 = vpack.c.b16 %v849, %v845
            %v894 = vpack.c.b16 %v850, %v846
            %v895 = vpack.c.b16 %v851, %v847
            %v896 = vpack.c.b16 %v856, %v852
            %v897 = vpack.c.b16 %v857, %v853
            %v898 = vpack.c.b16 %v858, %v854
            %v899 = vpack.c.b16 %v859, %v855
            %v900 = vpack.c.b16 %v864, %v860
            %v901 = vpack.c.b16 %v865, %v861
            %v902 = vpack.c.b16 %v866, %v862
            %v903 = vpack.c.b16 %v867, %v863
            %v904 = vpack.c.b16 %v872, %v868
            %v905 = vpack.c.b16 %v873, %v869
            %v906 = vpack.c.b16 %v874, %v870
            %v907 = vpack.c.b16 %v875, %v871
            %940 = vmatpush.bf16.msra.mxu0 %v904
            %941 = vmatpush.bf16.msra.mxu0 %v900
            %942 = vmatpush.bf16.msra.mxu0 %v896
            %943 = vmatpush.bf16.msra.mxu0 %v892
            %944 = vmatpush.bf16.msra.mxu0 %v888
            %945 = vmatpush.bf16.msra.mxu0 %v884
            %946 = vmatpush.bf16.msra.mxu0 %v880
            %947 = vmatpush.bf16.msra.mxu0 %v876
            %948 = vmatmul.bf16.gmra.mxu0 %v744
            %v949 = vpop.f32.mrf.mxu0
            %v950 = vadd.f32 0.0, %v949
            %v951 = vpop.f32.mrf.mxu0
            %952 = vdwg.mxu0
            %953 = vmatpush.bf16.msra.mxu0 %v905
            %954 = vmatpush.bf16.msra.mxu0 %v901
            %955 = vmatpush.bf16.msra.mxu0 %v897
            %956 = vmatpush.bf16.msra.mxu0 %v893
            %957 = vmatpush.bf16.msra.mxu0 %v889
            %958 = vmatpush.bf16.msra.mxu0 %v885
            %959 = vmatpush.bf16.msra.mxu0 %v881
            %960 = vmatpush.bf16.msra.mxu0 %v877
            %961 = vmatmul.bf16.gmra.mxu0 %v744
            %v962 = vpop.f32.mrf.mxu0
            %v963 = vadd.f32 0.0, %v962
            %v964 = vpop.f32.mrf.mxu0
            %965 = vdwg.mxu0
            %966 = vmatpush.bf16.msra.mxu0 %v906
            %967 = vmatpush.bf16.msra.mxu0 %v902
            %968 = vmatpush.bf16.msra.mxu0 %v898
            %969 = vmatpush.bf16.msra.mxu0 %v894
            %970 = vmatpush.bf16.msra.mxu0 %v890
            %971 = vmatpush.bf16.msra.mxu0 %v886
            %972 = vmatpush.bf16.msra.mxu0 %v882
            %973 = vmatpush.bf16.msra.mxu0 %v878
            %974 = vmatmul.bf16.gmra.mxu0 %v744
            %v975 = vpop.f32.mrf.mxu0
            %v976 = vadd.f32 0.0, %v975
            %v977 = vpop.f32.mrf.mxu0
            %978 = vdwg.mxu0
            %979 = vmatpush.bf16.msra.mxu0 %v907
            %980 = vmatpush.bf16.msra.mxu0 %v903
            %981 = vmatpush.bf16.msra.mxu0 %v899
            %982 = vmatpush.bf16.msra.mxu0 %v895
            %983 = vmatpush.bf16.msra.mxu0 %v891
            %984 = vmatpush.bf16.msra.mxu0 %v887
            %985 = vmatpush.bf16.msra.mxu0 %v883
            %986 = vmatpush.bf16.msra.mxu0 %v879
            %987 = vmatmul.bf16.gmra.mxu0 %v744
            %v988 = vpop.f32.mrf.mxu0
            %v989 = vadd.f32 0.0, %v988
            %v990 = vpop.f32.mrf.mxu0
            %991 = vdwg.mxu0
            %v992 = vadd.f32 %v737, %v950
            %v993 = vadd.f32 %v738, %v963
            %v994 = vadd.f32 %v739, %v976
            %v995 = vadd.f32 %v740, %v989
          $region84: #{rwcnet_forward.1} parent=78 // loop_footer
            %s736 = sadd.s32 1, %s732
          $region85: #{rwcnet_forward.1} parent=78 // loop_footer_branch
            %731 = sbr.rel target = $region81
          $region86: #{rwcnet_forward.1} parent=78 // loop_exit
            _
          %v996 = vld [vmem:[#allocation8] sm:$0xf]
          %v998 = vperm.slane %v996, 0
          %v999 = vperm.slane %v996, 1
          %v1000 = vperm.slane %v996, 2
          %v1001 = vperm.slane %v996, 3
          %v1006 = vadd.f32 %v737, %v998
          %v1007 = vadd.f32 %v738, %v999
          %v1008 = vadd.f32 %v739, %v1000
          %v1009 = vadd.f32 %v740, %v1001
          %v1010 = vmax.f32 %v1006, 0.0
          %v1011 = vmax.f32 %v1007, 0.0
          %v1012 = vmax.f32 %v1008, 0.0
          %v1013 = vmax.f32 %v1009, 0.0
          %v1014 = vpack.c.bf16 %v1010, %v1010
          %v1015 = vpack.c.bf16 %v1011, %v1011
          %v1016 = vpack.c.bf16 %v1012, %v1012
          %v1017 = vpack.c.bf16 %v1013, %v1013
          %v1018 = vld [vmem:[#allocation9] sm:$0xf]
          %v1019 = vld [vmem:[#allocation9 + $0x4] sm:$0xf]
          %v1020 = vld [vmem:[#allocation9 + $0x8] sm:$0xf]
          %v1021 = vld [vmem:[#allocation9 + $0xc] sm:$0xf]
          %v1022 = vld [vmem:[#allocation9 + $0x10] sm:$0xf]
          %v1023 = vld [vmem:[#allocation9 + $0x14] sm:$0xf]
          %v1024 = vld [vmem:[#allocation9 + $0x18] sm:$0xf]
          %v1025 = vld [vmem:[#allocation9 + $0x1c] sm:$0xf]
          %v1026 = vld [vmem:[#allocation9 + $0x20] sm:$0xf]
          %v1027 = vld [vmem:[#allocation9 + $0x24] sm:$0xf]
          %v1028 = vld [vmem:[#allocation9 + $0x28] sm:$0xf]
          %v1029 = vld [vmem:[#allocation9 + $0x2c] sm:$0xf]
          %v1030 = vld [vmem:[#allocation9 + $0x30] sm:$0xf]
          %v1031 = vld [vmem:[#allocation9 + $0x34] sm:$0xf]
          %v1032 = vld [vmem:[#allocation9 + $0x38] sm:$0xf]
          %v1033 = vld [vmem:[#allocation9 + $0x3c] sm:$0xf]
          %v1034 = vld [vmem:[#allocation9 + $0x40] sm:$0xf]
          %v1035 = vld [vmem:[#allocation9 + $0x44] sm:$0xf]
          %v1036 = vld [vmem:[#allocation9 + $0x48] sm:$0xf]
          %v1037 = vld [vmem:[#allocation9 + $0x4c] sm:$0xf]
          %v1038 = vld [vmem:[#allocation9 + $0x50] sm:$0xf]
          %v1039 = vld [vmem:[#allocation9 + $0x54] sm:$0xf]
          %v1040 = vld [vmem:[#allocation9 + $0x58] sm:$0xf]
          %v1041 = vld [vmem:[#allocation9 + $0x5c] sm:$0xf]
          %v1042 = vld [vmem:[#allocation9 + $0x60] sm:$0xf]
          %v1043 = vld [vmem:[#allocation9 + $0x64] sm:$0xf]
          %v1044 = vld [vmem:[#allocation9 + $0x68] sm:$0xf]
          %v1045 = vld [vmem:[#allocation9 + $0x6c] sm:$0xf]
          %v1046 = vld [vmem:[#allocation9 + $0x70] sm:$0xf]
          %v1047 = vld [vmem:[#allocation9 + $0x74] sm:$0xf]
          %v1048 = vld [vmem:[#allocation9 + $0x78] sm:$0xf]
          %v1049 = vld [vmem:[#allocation9 + $0x7c] sm:$0xf]
          %v1050 = vld [vmem:[#allocation9 + $0x80] sm:$0xf]
          %v1051 = vld [vmem:[#allocation9 + $0x84] sm:$0xf]
          %v1052 = vld [vmem:[#allocation9 + $0x88] sm:$0xf]
          %v1053 = vld [vmem:[#allocation9 + $0x8c] sm:$0xf]
          %v1054 = vld [vmem:[#allocation9 + $0x90] sm:$0xf]
          %v1055 = vld [vmem:[#allocation9 + $0x94] sm:$0xf]
          %v1056 = vld [vmem:[#allocation9 + $0x98] sm:$0xf]
          %v1057 = vld [vmem:[#allocation9 + $0x9c] sm:$0xf]
          %v1058 = vld [vmem:[#allocation9 + $0xa0] sm:$0xf]
          %v1059 = vld [vmem:[#allocation9 + $0xa4] sm:$0xf]
          %v1060 = vld [vmem:[#allocation9 + $0xa8] sm:$0xf]
          %v1061 = vld [vmem:[#allocation9 + $0xac] sm:$0xf]
          %v1062 = vld [vmem:[#allocation9 + $0xb0] sm:$0xf]
          %v1063 = vld [vmem:[#allocation9 + $0xb4] sm:$0xf]
          %v1064 = vld [vmem:[#allocation9 + $0xb8] sm:$0xf]
          %v1065 = vld [vmem:[#allocation9 + $0xbc] sm:$0xf]
          %v1066 = vld [vmem:[#allocation9 + $0xc0] sm:$0xf]
          %v1067 = vld [vmem:[#allocation9 + $0xc4] sm:$0xf]
          %v1068 = vld [vmem:[#allocation9 + $0xc8] sm:$0xf]
          %v1069 = vld [vmem:[#allocation9 + $0xcc] sm:$0xf]
          %v1070 = vld [vmem:[#allocation9 + $0xd0] sm:$0xf]
          %v1071 = vld [vmem:[#allocation9 + $0xd4] sm:$0xf]
          %v1072 = vld [vmem:[#allocation9 + $0xd8] sm:$0xf]
          %v1073 = vld [vmem:[#allocation9 + $0xdc] sm:$0xf]
          %v1074 = vld [vmem:[#allocation9 + $0xe0] sm:$0xf]
          %v1075 = vld [vmem:[#allocation9 + $0xe4] sm:$0xf]
          %v1076 = vld [vmem:[#allocation9 + $0xe8] sm:$0xf]
          %v1077 = vld [vmem:[#allocation9 + $0xec] sm:$0xf]
          %v1078 = vld [vmem:[#allocation9 + $0xf0] sm:$0xf]
          %v1079 = vld [vmem:[#allocation9 + $0xf4] sm:$0xf]
          %v1080 = vld [vmem:[#allocation9 + $0xf8] sm:$0xf]
          %v1081 = vld [vmem:[#allocation9 + $0xfc] sm:$0xf]
          %v1082 = vld [vmem:[#allocation11] sm:$0x1]
          %v1147 = vunpack.c.l.b16 %v1018
          %v1148 = vunpack.c.l.b16 %v1019
          %v1149 = vunpack.c.l.b16 %v1020
          %v1150 = vunpack.c.l.b16 %v1021
          %v1151 = vunpack.c.l.b16 %v1022
          %v1152 = vunpack.c.l.b16 %v1023
          %v1153 = vunpack.c.l.b16 %v1024
          %v1154 = vunpack.c.l.b16 %v1025
          %v1155 = vunpack.c.l.b16 %v1026
          %v1156 = vunpack.c.l.b16 %v1027
          %v1157 = vunpack.c.l.b16 %v1028
          %v1158 = vunpack.c.l.b16 %v1029
          %v1159 = vunpack.c.l.b16 %v1030
          %v1160 = vunpack.c.l.b16 %v1031
          %v1161 = vunpack.c.l.b16 %v1032
          %v1162 = vunpack.c.l.b16 %v1033
          %v1163 = vunpack.c.l.b16 %v1034
          %v1164 = vunpack.c.l.b16 %v1035
          %v1165 = vunpack.c.l.b16 %v1036
          %v1166 = vunpack.c.l.b16 %v1037
          %v1167 = vunpack.c.l.b16 %v1038
          %v1168 = vunpack.c.l.b16 %v1039
          %v1169 = vunpack.c.l.b16 %v1040
          %v1170 = vunpack.c.l.b16 %v1041
          %v1171 = vunpack.c.l.b16 %v1042
          %v1172 = vunpack.c.l.b16 %v1043
          %v1173 = vunpack.c.l.b16 %v1044
          %v1174 = vunpack.c.l.b16 %v1045
          %v1175 = vunpack.c.l.b16 %v1046
          %v1176 = vunpack.c.l.b16 %v1047
          %v1177 = vunpack.c.l.b16 %v1048
          %v1178 = vunpack.c.l.b16 %v1049
          %v1179 = vunpack.c.l.b16 %v1050
          %v1180 = vunpack.c.l.b16 %v1051
          %v1181 = vunpack.c.l.b16 %v1052
          %v1182 = vunpack.c.l.b16 %v1053
          %v1183 = vunpack.c.l.b16 %v1054
          %v1184 = vunpack.c.l.b16 %v1055
          %v1185 = vunpack.c.l.b16 %v1056
          %v1186 = vunpack.c.l.b16 %v1057
          %v1187 = vunpack.c.l.b16 %v1058
          %v1188 = vunpack.c.l.b16 %v1059
          %v1189 = vunpack.c.l.b16 %v1060
          %v1190 = vunpack.c.l.b16 %v1061
          %v1191 = vunpack.c.l.b16 %v1062
          %v1192 = vunpack.c.l.b16 %v1063
          %v1193 = vunpack.c.l.b16 %v1064
          %v1194 = vunpack.c.l.b16 %v1065
          %v1195 = vunpack.c.l.b16 %v1066
          %v1196 = vunpack.c.l.b16 %v1067
          %v1197 = vunpack.c.l.b16 %v1068
          %v1198 = vunpack.c.l.b16 %v1069
          %v1199 = vunpack.c.l.b16 %v1070
          %v1200 = vunpack.c.l.b16 %v1071
          %v1201 = vunpack.c.l.b16 %v1072
          %v1202 = vunpack.c.l.b16 %v1073
          %v1203 = vunpack.c.l.b16 %v1074
          %v1204 = vunpack.c.l.b16 %v1075
          %v1205 = vunpack.c.l.b16 %v1076
          %v1206 = vunpack.c.l.b16 %v1077
          %v1207 = vunpack.c.l.b16 %v1078
          %v1208 = vunpack.c.l.b16 %v1079
          %v1209 = vunpack.c.l.b16 %v1080
          %v1210 = vunpack.c.l.b16 %v1081
          %v1211 = vpack.c.b16 %v1148, %v1147
          %v1212 = vpack.c.b16 %v1150, %v1149
          %v1213 = vpack.c.b16 %v1152, %v1151
          %v1214 = vpack.c.b16 %v1154, %v1153
          %v1215 = vpack.c.b16 %v1156, %v1155
          %v1216 = vpack.c.b16 %v1158, %v1157
          %v1217 = vpack.c.b16 %v1160, %v1159
          %v1218 = vpack.c.b16 %v1162, %v1161
          %v1219 = vpack.c.b16 %v1164, %v1163
          %v1220 = vpack.c.b16 %v1166, %v1165
          %v1221 = vpack.c.b16 %v1168, %v1167
          %v1222 = vpack.c.b16 %v1170, %v1169
          %v1223 = vpack.c.b16 %v1172, %v1171
          %v1224 = vpack.c.b16 %v1174, %v1173
          %v1225 = vpack.c.b16 %v1176, %v1175
          %v1226 = vpack.c.b16 %v1178, %v1177
          %v1227 = vpack.c.b16 %v1180, %v1179
          %v1228 = vpack.c.b16 %v1182, %v1181
          %v1229 = vpack.c.b16 %v1184, %v1183
          %v1230 = vpack.c.b16 %v1186, %v1185
          %v1231 = vpack.c.b16 %v1188, %v1187
          %v1232 = vpack.c.b16 %v1190, %v1189
          %v1233 = vpack.c.b16 %v1192, %v1191
          %v1234 = vpack.c.b16 %v1194, %v1193
          %v1235 = vpack.c.b16 %v1196, %v1195
          %v1236 = vpack.c.b16 %v1198, %v1197
          %v1237 = vpack.c.b16 %v1200, %v1199
          %v1238 = vpack.c.b16 %v1202, %v1201
          %v1239 = vpack.c.b16 %v1204, %v1203
          %v1240 = vpack.c.b16 %v1206, %v1205
          %v1241 = vpack.c.b16 %v1208, %v1207
          %v1242 = vpack.c.b16 %v1210, %v1209
          %1275 = vmatpush.bf16.msra.mxu0 %v1218
          %1276 = vmatpush.bf16.msra.mxu0 %v1217
          %1277 = vmatpush.bf16.msra.mxu0 %v1216
          %1278 = vmatpush.bf16.msra.mxu0 %v1215
          %1279 = vmatpush.bf16.msra.mxu0 %v1214
          %1280 = vmatpush.bf16.msra.mxu0 %v1213
          %1281 = vmatpush.bf16.msra.mxu0 %v1212
          %1282 = vmatpush.bf16.msra.mxu0 %v1211
          %1283 = vmatmul.bf16.gmra.mxu0 %v1014
          %v1284 = vpop.f32.mrf.mxu0
          %v1285 = vadd.f32 %v1082, %v1284
          %v1286 = vpop.f32.mrf.mxu0
          %1287 = vdwg.mxu0
          %1288 = vmatpush.bf16.msra.mxu0 %v1226
          %1289 = vmatpush.bf16.msra.mxu0 %v1225
          %1290 = vmatpush.bf16.msra.mxu0 %v1224
          %1291 = vmatpush.bf16.msra.mxu0 %v1223
          %1292 = vmatpush.bf16.msra.mxu0 %v1222
          %1293 = vmatpush.bf16.msra.mxu0 %v1221
          %1294 = vmatpush.bf16.msra.mxu0 %v1220
          %1295 = vmatpush.bf16.msra.mxu0 %v1219
          %1296 = vmatmul.bf16.gmra.mxu0 %v1015
          %v1297 = vpop.f32.mrf.mxu0
          %v1298 = vadd.f32 %v1285, %v1297
          %v1299 = vpop.f32.mrf.mxu0
          %1300 = vdwg.mxu0
          %1301 = vmatpush.bf16.msra.mxu0 %v1234
          %1302 = vmatpush.bf16.msra.mxu0 %v1233
          %1303 = vmatpush.bf16.msra.mxu0 %v1232
          %1304 = vmatpush.bf16.msra.mxu0 %v1231
          %1305 = vmatpush.bf16.msra.mxu0 %v1230
          %1306 = vmatpush.bf16.msra.mxu0 %v1229
          %1307 = vmatpush.bf16.msra.mxu0 %v1228
          %1308 = vmatpush.bf16.msra.mxu0 %v1227
          %1309 = vmatmul.bf16.gmra.mxu0 %v1016
          %v1310 = vpop.f32.mrf.mxu0
          %v1311 = vadd.f32 %v1298, %v1310
          %v1312 = vpop.f32.mrf.mxu0
          %1313 = vdwg.mxu0
          %1314 = vmatpush.bf16.msra.mxu0 %v1242
          %1315 = vmatpush.bf16.msra.mxu0 %v1241
          %1316 = vmatpush.bf16.msra.mxu0 %v1240
          %1317 = vmatpush.bf16.msra.mxu0 %v1239
          %1318 = vmatpush.bf16.msra.mxu0 %v1238
          %1319 = vmatpush.bf16.msra.mxu0 %v1237
          %1320 = vmatpush.bf16.msra.mxu0 %v1236
          %1321 = vmatpush.bf16.msra.mxu0 %v1235
          %1322 = vmatmul.bf16.gmra.mxu0 %v1017
          %v1323 = vpop.f32.mrf.mxu0
          %v1324 = vadd.f32 %v1311, %v1323
          %v1325 = vpop.f32.mrf.mxu0
          %1326 = vdwg.mxu0
          %vm1327 = vcmask 1040384
          %v1328 = vsel %vm1327, %v1324, -inf
          %1329 = vmax.xlane.f32.xlu0 %v1328
          %v1330 = vpop.xlane.xlu0 %1329
          %v1331 = vsub.f32 %v1324, %v1330
          %v1332 = vmul.f32 %v1331, 1.442695
          %v1333 = vpow.pop %v1332
          %v1334 = vsel %vm1327, %v1333, 0.0
          %1335 = vadd.xlane.f32.xlu0 %v1334
          %v1336 = vpop.xlane.xlu0 %1335
          %v1337 = vlog2.pop %v1336
          %v1338 = vmul.f32 %v1337, 0.6931472
          %v1339 = vadd.f32 %v1330, %v1338
          %v1340 = vsub.f32 %v1324, %v1339
          %1341 = vst [vmem:[%s345] sm:$0x1] %v1340
        $region79: #{rwcnet_forward.1} parent=43 // pred_fallthru
          _
        %s1342 = sand.u32 %s176, 1
        %s1343 = scalar_lea.sflag [#allocation5], %s1342
        %s1344 = sand.u32 %s176, 1
        %s1345 = scalar_lea.vmem [#allocation12], %s1344
        // Predicated region
        $region87: #{rwcnet_forward.1} parent=43 // pred_check
          %p1346 = pneg %p186
        $region88: #{rwcnet_forward.1} parent=43 // pred_check_branch
          %1348 = sbr.rel (%p1346) target = $region90
        $region89: #{rwcnet_forward.1} parent=43 // pred_region
          %1350 = vsyncadd %s1343, 0
          %s1351 = scalar_lea.hbm %s6, %s27
          %s1353 = sshll.u32 %s1345, 4
          %s1354 = int_to_ptr.vmem [resolvable:$true] %s1353
          %s1355 = sshll.u32 %s1351, 4
          %s1356 = int_to_ptr.hbm [resolvable:$true] %s1355
          %1358 = dma.vmem_to_hbm [thread:$0]  %s1354, 16, %s1356, %s1343
        $region90: #{rwcnet_forward.1} parent=43 // pred_fallthru
          _
      $region44: #{rwcnet_forward.1} parent=5 // pred_fallthru
        _
      %p1359 = scmp.le.s32.totalorder 2, %s18
      // Predicated region
      $region91: #{rwcnet_forward.1} parent=5 // pred_check
        %p1360 = pneg %p1359
      $region92: #{rwcnet_forward.1} parent=5 // pred_check_branch
        %1362 = sbr.rel (%p1360) target = $region94
      $region93: #{rwcnet_forward.1} parent=5 // pred_region
        %s1363 = ssub.s32 %s18, 2
        // Predicated region
        $region95: #{rwcnet_forward.1} parent=93 // pred_check
          %p1364 = pneg %p192
        $region96: #{rwcnet_forward.1} parent=93 // pred_check_branch
          %1366 = sbr.rel (%p1364) target = $region98
        $region97: #{rwcnet_forward.1} parent=93 // pred_region
          %s1367 = sand.u32 %s177, 1
          %s1368 = scalar_lea.sflag [#allocation5], %s1367
          %s1369 = sand.u32 %s177, 1
          %s1370 = scalar_lea.vmem [#allocation12], %s1369
          %1372 = dma.done %s1368, 16
        $region98: #{rwcnet_forward.1} parent=93 // pred_fallthru
          _
      $region94: #{rwcnet_forward.1} parent=5 // pred_fallthru
        _
    $region6: #{rwcnet_forward.1} parent=1 // loop_footer
      %s22 = sadd.s32 1, %s18
    $region7: #{rwcnet_forward.1} parent=1 // loop_footer_branch
      %17 = sbr.rel target = $region3
    $region8: #{rwcnet_forward.1} parent=1 // loop_exit
      _
    %1373 = vsyncpa [#allocation4], 1
    %s1374 = scalar_lea.sflag [#allocation4], 1
    %1375 = vsyncpa %s1374, 1
    %1376 = vsyncpa [#allocation7], 1
    %1377 = vsyncpa [#allocation10], 1
    %1378 = vsyncpa [#allocation5], 1
    %s1379 = scalar_lea.sflag [#allocation5], 1
    %1380 = vsyncpa %s1379, 1

</llo_original>
